<compile_context>
chip_gen: v6e
topology: v6e:2x2x1
jax: 0.10.0
libtpu: 0.0.40
codegen_flags: <defaults>
</compile_context>

<pallas_src>
import functools

import jax
import jax.numpy as jnp
from jax import lax
from jax.experimental import pallas as pl
from jax.experimental.pallas import tpu as pltpu


def _round_up(x, m):
    return (x + m - 1) // m * m


def _down_kernel(x0_ref, x1_ref, x2_ref, w01_ref, w2_ref, b_ref, o_ref, *,
                 th, w_out, c_in):
    """One (batch, row-tile) step of Conv2d(k=3, s=2, p=1) + bias + ReLU.

    x*_ref : (1, th, w_out+1, 2*c_in)  row-parity tap kh = 0/1/2.  Lane axis
             packs column parity q and channel c as j = q*c_in + c, i.e.
             x*_ref[0, h, p, q*c_in + c] = x_pad[n, 2*(row0+h)+kh, 2*p+q, c].
    w01_ref: (3, 2*c_in, c_pad)  weights for kw=0 (first c_in rows) and kw=1.
    w2_ref : (3,   c_in, c_pad)  weights for kw=2.
    b_ref  : (1, c_pad)          bias (f32, already padded).
    o_ref  : (1, th, w_out, c_pad) output tile (f32).
    """
    m = th * w_out
    c_pad = o_ref.shape[-1]
    acc = jnp.zeros((m, c_pad), dtype=jnp.float32)
    for kh, x_ref in enumerate((x0_ref, x1_ref, x2_ref)):
        blk = x_ref[0]                                   # (th, w_out+1, 2*c_in)
        # kw=0 and kw=1 taps: columns 2*wo and 2*wo+1 both live in pair wo.
        a01 = blk[:, :w_out, :].reshape(m, 2 * c_in)
        # kw=2 tap: column 2*wo+2 is parity-0 of pair wo+1.
        a2 = blk[:, 1:, :c_in].reshape(m, c_in)
        acc = acc + jnp.dot(a01, w01_ref[kh], preferred_element_type=jnp.float32)
        acc = acc + jnp.dot(a2, w2_ref[kh], preferred_element_type=jnp.float32)
    out = jnp.maximum(acc + b_ref[...], 0.0)             # fused bias + ReLU
    o_ref[...] = out.reshape(1, th, w_out, c_pad).astype(o_ref.dtype)


def _pick_row_tile(h_out, w_out, c_in, c_pad, in_bytes):
    """Pick output-row tile th: ~<=1024 rows of the flattened matmul per step,
    divisor of h_out (no partial blocks), bounded VMEM footprint."""
    target = max(1, 1024 // max(w_out, 1))
    th = min(h_out, target)

    def vmem_bytes(t):
        inp = 3 * t * (w_out + 1) * 2 * c_in * in_bytes          # 3 tap blocks
        outp = t * w_out * c_pad * 4
        wts = 9 * c_in * c_pad * in_bytes
        return 2 * (inp + outp) + wts + c_pad * 4                # double-buffered

    while th > 1 and (h_out % th != 0 or vmem_bytes(th) > 24 * 1024 * 1024):
        th -= 1
    return max(th, 1)


def down_forward(x_nchw, weight_oihw, bias, *, compute_dtype=jnp.float32):
    """Forward pass of Down: Conv2d(k=3, s=2, p=1) + ReLU.

    x_nchw:      (N, C_in, H, W)      float32  (PyTorch layout at the boundary)
    weight_oihw: (C_out, C_in, 3, 3)  float32
    bias:        (C_out,)             float32
    returns:     (N, C_out, H_out, W_out) float32
    """
    N, C_in, H, W = x_nchw.shape
    C_out = weight_oihw.shape[0]
    H_out = (H + 2 - 3) // 2 + 1
    W_out = (W + 2 - 3) // 2 + 1
    C_pad = _round_up(C_out, 128)          # lane-dense output / MXU columns

    # ---- glue: NCHW -> NHWC; pad so padded H = 2*H_out+1, padded W = 2*(W_out+1)
    x_nhwc = jnp.transpose(x_nchw, (0, 2, 3, 1))
    pad_b = 2 * H_out + 1 - (H + 1)
    pad_r = 2 * (W_out + 1) - (W + 1)
    x_pad = jnp.pad(x_nhwc, ((0, 0), (1, pad_b), (1, pad_r), (0, 0)))

    # Three row-parity tap arrays (kh = 0,1,2), each (N, H_out, W_out+1, 2*C_in).
    # Total ~1.5x the input, vs 2.25x for a full im2col materialization.
    taps = []
    for kh in range(3):
        r = x_pad[:, kh:kh + 2 * H_out - 1:2, :, :]      # (N, H_out, 2*(W_out+1), C_in)
        r = r.reshape(N, H_out, W_out + 1, 2 * C_in)     # pack column parity into lanes
        taps.append(r.astype(compute_dtype))

    # Weights: (C_out, C_in, 3, 3) -> (3, 3, C_in, C_out), pad C_out, pack kw.
    w_t = jnp.transpose(weight_oihw, (2, 3, 1, 0))
    w_t = jnp.pad(w_t, ((0, 0), (0, 0), (0, 0), (0, C_pad - C_out)))
    w01 = jnp.concatenate([w_t[:, 0], w_t[:, 1]], axis=1).astype(compute_dtype)  # (3, 2*C_in, C_pad)
    w2 = w_t[:, 2].astype(compute_dtype)                                         # (3, C_in, C_pad)
    b_pad = jnp.pad(bias, (0, C_pad - C_out)).reshape(1, C_pad).astype(jnp.float32)

    th = _pick_row_tile(H_out, W_out, C_in, C_pad, jnp.dtype(compute_dtype).itemsize)
    grid = (N, H_out // th)

    # TODO(synk): for very large C_in (>= ~512) add a K grid axis ("arbitrary",
    # last) with a VMEM accumulator + pl.when init/finalize to bound VMEM further.
    kernel = functools.partial(_down_kernel, th=th, w_out=W_out, c_in=C_in)

    out_nhwc = pl.pallas_call(
        kernel,
        out_shape=jax.ShapeDtypeStruct((N, H_out, W_out, C_pad), jnp.float32),
        grid=grid,
        in_specs=[
            pl.BlockSpec((1, th, W_out + 1, 2 * C_in), lambda n, t: (n, t, 0, 0)),
            pl.BlockSpec((1, th, W_out + 1, 2 * C_in), lambda n, t: (n, t, 0, 0)),
            pl.BlockSpec((1, th, W_out + 1, 2 * C_in), lambda n, t: (n, t, 0, 0)),
            pl.BlockSpec((3, 2 * C_in, C_pad), lambda n, t: (0, 0, 0)),
            pl.BlockSpec((3, C_in, C_pad), lambda n, t: (0, 0, 0)),
            pl.BlockSpec((1, C_pad), lambda n, t: (0, 0)),
        ],
        out_specs=pl.BlockSpec((1, th, W_out, C_pad), lambda n, t: (n, t, 0, 0)),
        compiler_params=pltpu.CompilerParams(
            dimension_semantics=("parallel", "parallel"),   # megacore-shardable
            vmem_limit_bytes=48 * 1024 * 1024,
        ),
    )(taps[0], taps[1], taps[2], w01, w2, b_pad)

    out = out_nhwc[:, :, :, :C_out]                      # drop channel padding
    return jnp.transpose(out, (0, 3, 1, 2))              # NHWC -> NCHW


def _reference(x_nchw, weight_oihw, bias):
    y = lax.conv_general_dilated(
        x_nchw, weight_oihw,
        window_strides=(2, 2),
        padding=((1, 1), (1, 1)),
        dimension_numbers=("NCHW", "OIHW", "NCHW"))
    y = y + bias.reshape(1, -1, 1, 1)
    return jnp.maximum(y, 0.0)


if __name__ == "__main__":
    N, C_in, C_out, H, W = 2, 4, 8, 16, 16

    key = jax.random.PRNGKey(0)
    x = jax.random.normal(key, (N, C_in, H, W), dtype=jnp.float32)

    # Deterministic parameter init (synthetic, not a checkpoint load).
    wkey, bkey = jax.random.split(jax.random.PRNGKey(42))
    fan_in = C_in * 9
    bound = 1.0 / (fan_in ** 0.5)
    weight = jax.random.uniform(wkey, (C_out, C_in, 3, 3),
                                minval=-bound, maxval=bound, dtype=jnp.float32)
    bias = jax.random.uniform(bkey, (C_out,),
                              minval=-bound, maxval=bound, dtype=jnp.float32)

    ref = _reference(x, weight, bias)

    # f32 path: exact numerics, tight tolerance.
    out = jax.block_until_ready(down_forward(x, weight, bias))
    assert out.shape == (N, C_out, H // 2, W // 2), out.shape
    assert jnp.allclose(out, ref, atol=1e-5, rtol=1e-5), float(
        jnp.max(jnp.abs(out - ref)))

    # bf16-input / f32-accumulate path (MXU-rate on v5e/v6e), loose tolerance.
    out_bf16 = jax.block_until_ready(
        down_forward(x, weight, bias, compute_dtype=jnp.bfloat16))
    assert jnp.allclose(out_bf16, ref, atol=5e-2, rtol=5e-2), float(
        jnp.max(jnp.abs(out_bf16 - ref)))

    print("KERNEL_OK")
</pallas_src>

<mosaic_0001>
module attributes {stable_mosaic.version = 11 : i64} {
  func.func @_down_kernel(%arg0: i32, %arg1: i32, %arg2: memref<1x8x9x8xf32, #tpu.memory_space<vmem>>, %arg3: memref<1x8x9x8xf32, #tpu.memory_space<vmem>>, %arg4: memref<1x8x9x8xf32, #tpu.memory_space<vmem>>, %arg5: memref<3x8x128xf32, #tpu.memory_space<vmem>>, %arg6: memref<3x4x128xf32, #tpu.memory_space<vmem>>, %arg7: memref<1x128xf32, #tpu.memory_space<vmem>>, %arg8: memref<1x8x8x128xf32, #tpu.memory_space<vmem>>) attributes {dimension_semantics = [#tpu.dimension_semantics<parallel>, #tpu.dimension_semantics<parallel>], iteration_bounds = array<i64: 2, 1>, scalar_prefetch = 0 : i64, scratch_operands = 0 : i64, tpu.core_type = #tpu.core_type<tc>, window_params = [{transform_indices = @transform_0, window_bounds = array<i64: 1, 8, 9, 8>}, {transform_indices = @transform_1, window_bounds = array<i64: 1, 8, 9, 8>}, {transform_indices = @transform_2, window_bounds = array<i64: 1, 8, 9, 8>}, {pipeline_mode = #tpu.pipeline_mode<synchronous>, transform_indices = @transform_3, window_bounds = array<i64: 3, 8, 128>}, {pipeline_mode = #tpu.pipeline_mode<synchronous>, transform_indices = @transform_4, window_bounds = array<i64: 3, 4, 128>}, {pipeline_mode = #tpu.pipeline_mode<synchronous>, transform_indices = @transform_5, window_bounds = array<i64: 1, 128>}, {transform_indices = @transform_6, window_bounds = array<i64: 1, 8, 8, 128>}]} {
    %cst = arith.constant 0.000000e+00 : f32
    %0 = vector.broadcast %cst : f32 to vector<64x128xf32>
    %c0 = arith.constant 0 : index
    %c0_0 = arith.constant 0 : index
    %c0_1 = arith.constant 0 : index
    %c0_2 = arith.constant 0 : index
    %1 = vector.load %arg2[%c0, %c0_0, %c0_1, %c0_2] : memref<1x8x9x8xf32, #tpu.memory_space<vmem>>, vector<1x8x9x8xf32>
    %2 = vector.shape_cast %1 : vector<1x8x9x8xf32> to vector<8x9x8xf32>
    %3 = vector.extract_strided_slice %2 {offsets = [0, 0, 0], sizes = [8, 8, 8], strides = [1, 1, 1]} : vector<8x9x8xf32> to vector<8x8x8xf32>
    %4 = vector.shape_cast %3 : vector<8x8x8xf32> to vector<64x8xf32>
    %5 = vector.extract_strided_slice %2 {offsets = [0, 1, 0], sizes = [8, 8, 4], strides = [1, 1, 1]} : vector<8x9x8xf32> to vector<8x8x4xf32>
    %6 = vector.shape_cast %5 : vector<8x8x4xf32> to vector<64x4xf32>
    %c0_3 = arith.constant 0 : index
    %c0_4 = arith.constant 0 : index
    %c0_5 = arith.constant 0 : index
    %7 = vector.load %arg5[%c0_3, %c0_4, %c0_5] : memref<3x8x128xf32, #tpu.memory_space<vmem>>, vector<1x8x128xf32>
    %8 = vector.shape_cast %7 : vector<1x8x128xf32> to vector<8x128xf32>
    %cst_6 = arith.constant dense<0.000000e+00> : vector<64x128xf32>
    %9 = tpu.matmul %4, %8, %cst_6 {dimension_numbers = #tpu.dot_dimension_numbers<[1], [0], [0], [1], [0, 0, 1, 1], [], []>} : vector<64x8xf32>, vector<8x128xf32>, vector<64x128xf32> -> vector<64x128xf32>
    %10 = arith.addf %0, %9 : vector<64x128xf32>
    %c0_7 = arith.constant 0 : index
    %c0_8 = arith.constant 0 : index
    %c0_9 = arith.constant 0 : index
    %11 = vector.load %arg6[%c0_7, %c0_8, %c0_9] : memref<3x4x128xf32, #tpu.memory_space<vmem>>, vector<1x4x128xf32>
    %12 = vector.shape_cast %11 : vector<1x4x128xf32> to vector<4x128xf32>
    %cst_10 = arith.constant dense<0.000000e+00> : vector<64x128xf32>
    %13 = tpu.matmul %6, %12, %cst_10 {dimension_numbers = #tpu.dot_dimension_numbers<[1], [0], [0], [1], [0, 0, 1, 1], [], []>} : vector<64x4xf32>, vector<4x128xf32>, vector<64x128xf32> -> vector<64x128xf32>
    %14 = arith.addf %10, %13 : vector<64x128xf32>
    %c0_11 = arith.constant 0 : index
    %c0_12 = arith.constant 0 : index
    %c0_13 = arith.constant 0 : index
    %c0_14 = arith.constant 0 : index
    %15 = vector.load %arg3[%c0_11, %c0_12, %c0_13, %c0_14] : memref<1x8x9x8xf32, #tpu.memory_space<vmem>>, vector<1x8x9x8xf32>
    %16 = vector.shape_cast %15 : vector<1x8x9x8xf32> to vector<8x9x8xf32>
    %17 = vector.extract_strided_slice %16 {offsets = [0, 0, 0], sizes = [8, 8, 8], strides = [1, 1, 1]} : vector<8x9x8xf32> to vector<8x8x8xf32>
    %18 = vector.shape_cast %17 : vector<8x8x8xf32> to vector<64x8xf32>
    %19 = vector.extract_strided_slice %16 {offsets = [0, 1, 0], sizes = [8, 8, 4], strides = [1, 1, 1]} : vector<8x9x8xf32> to vector<8x8x4xf32>
    %20 = vector.shape_cast %19 : vector<8x8x4xf32> to vector<64x4xf32>
    %c1 = arith.constant 1 : index
    %c0_15 = arith.constant 0 : index
    %c0_16 = arith.constant 0 : index
    %21 = vector.load %arg5[%c1, %c0_15, %c0_16] : memref<3x8x128xf32, #tpu.memory_space<vmem>>, vector<1x8x128xf32>
    %22 = vector.shape_cast %21 : vector<1x8x128xf32> to vector<8x128xf32>
    %cst_17 = arith.constant dense<0.000000e+00> : vector<64x128xf32>
    %23 = tpu.matmul %18, %22, %cst_17 {dimension_numbers = #tpu.dot_dimension_numbers<[1], [0], [0], [1], [0, 0, 1, 1], [], []>} : vector<64x8xf32>, vector<8x128xf32>, vector<64x128xf32> -> vector<64x128xf32>
    %24 = arith.addf %14, %23 : vector<64x128xf32>
    %c1_18 = arith.constant 1 : index
    %c0_19 = arith.constant 0 : index
    %c0_20 = arith.constant 0 : index
    %25 = vector.load %arg6[%c1_18, %c0_19, %c0_20] : memref<3x4x128xf32, #tpu.memory_space<vmem>>, vector<1x4x128xf32>
    %26 = vector.shape_cast %25 : vector<1x4x128xf32> to vector<4x128xf32>
    %cst_21 = arith.constant dense<0.000000e+00> : vector<64x128xf32>
    %27 = tpu.matmul %20, %26, %cst_21 {dimension_numbers = #tpu.dot_dimension_numbers<[1], [0], [0], [1], [0, 0, 1, 1], [], []>} : vector<64x4xf32>, vector<4x128xf32>, vector<64x128xf32> -> vector<64x128xf32>
    %28 = arith.addf %24, %27 : vector<64x128xf32>
    %c0_22 = arith.constant 0 : index
    %c0_23 = arith.constant 0 : index
    %c0_24 = arith.constant 0 : index
    %c0_25 = arith.constant 0 : index
    %29 = vector.load %arg4[%c0_22, %c0_23, %c0_24, %c0_25] : memref<1x8x9x8xf32, #tpu.memory_space<vmem>>, vector<1x8x9x8xf32>
    %30 = vector.shape_cast %29 : vector<1x8x9x8xf32> to vector<8x9x8xf32>
    %31 = vector.extract_strided_slice %30 {offsets = [0, 0, 0], sizes = [8, 8, 8], strides = [1, 1, 1]} : vector<8x9x8xf32> to vector<8x8x8xf32>
    %32 = vector.shape_cast %31 : vector<8x8x8xf32> to vector<64x8xf32>
    %33 = vector.extract_strided_slice %30 {offsets = [0, 1, 0], sizes = [8, 8, 4], strides = [1, 1, 1]} : vector<8x9x8xf32> to vector<8x8x4xf32>
    %34 = vector.shape_cast %33 : vector<8x8x4xf32> to vector<64x4xf32>
    %c2 = arith.constant 2 : index
    %c0_26 = arith.constant 0 : index
    %c0_27 = arith.constant 0 : index
    %35 = vector.load %arg5[%c2, %c0_26, %c0_27] : memref<3x8x128xf32, #tpu.memory_space<vmem>>, vector<1x8x128xf32>
    %36 = vector.shape_cast %35 : vector<1x8x128xf32> to vector<8x128xf32>
    %cst_28 = arith.constant dense<0.000000e+00> : vector<64x128xf32>
    %37 = tpu.matmul %32, %36, %cst_28 {dimension_numbers = #tpu.dot_dimension_numbers<[1], [0], [0], [1], [0, 0, 1, 1], [], []>} : vector<64x8xf32>, vector<8x128xf32>, vector<64x128xf32> -> vector<64x128xf32>
    %38 = arith.addf %28, %37 : vector<64x128xf32>
    %c2_29 = arith.constant 2 : index
    %c0_30 = arith.constant 0 : index
    %c0_31 = arith.constant 0 : index
    %39 = vector.load %arg6[%c2_29, %c0_30, %c0_31] : memref<3x4x128xf32, #tpu.memory_space<vmem>>, vector<1x4x128xf32>
    %40 = vector.shape_cast %39 : vector<1x4x128xf32> to vector<4x128xf32>
    %cst_32 = arith.constant dense<0.000000e+00> : vector<64x128xf32>
    %41 = tpu.matmul %34, %40, %cst_32 {dimension_numbers = #tpu.dot_dimension_numbers<[1], [0], [0], [1], [0, 0, 1, 1], [], []>} : vector<64x4xf32>, vector<4x128xf32>, vector<64x128xf32> -> vector<64x128xf32>
    %42 = arith.addf %38, %41 : vector<64x128xf32>
    %c0_33 = arith.constant 0 : index
    %c0_34 = arith.constant 0 : index
    %43 = vector.load %arg7[%c0_33, %c0_34] : memref<1x128xf32, #tpu.memory_space<vmem>>, vector<1x128xf32>
    %44 = vector.broadcast %43 : vector<1x128xf32> to vector<64x128xf32>
    %45 = arith.addf %42, %44 : vector<64x128xf32>
    %cst_35 = arith.constant 0.000000e+00 : f32
    %46 = vector.broadcast %cst_35 : f32 to vector<64x128xf32>
    %47 = arith.maximumf %45, %46 : vector<64x128xf32>
    %48 = vector.shape_cast %47 : vector<64x128xf32> to vector<1x8x8x128xf32>
    %c0_36 = arith.constant 0 : index
    %c0_37 = arith.constant 0 : index
    %c0_38 = arith.constant 0 : index
    %c0_39 = arith.constant 0 : index
    %49 = vector.load %arg8[%c0_36, %c0_37, %c0_38, %c0_39] : memref<1x8x8x128xf32, #tpu.memory_space<vmem>>, vector<1x8x8x128xf32>
    tpu.vector_store %arg8[%c0_36, %c0_37, %c0_38, %c0_39], %48 {strides = array<i32>} : memref<1x8x8x128xf32, #tpu.memory_space<vmem>>, vector<1x8x8x128xf32>,
    return
  }
  func.func @transform_0(%arg0: i32, %arg1: i32) -> (i32, i32, i32, i32) {
    %c0_i32 = arith.constant 0 : i32
    %c0_i32_0 = arith.constant 0 : i32
    %c0_i32_1 = arith.constant 0 : i32
    return %arg0, %arg1, %c0_i32, %c0_i32_0 : i32, i32, i32, i32
  }
  func.func @transform_1(%arg0: i32, %arg1: i32) -> (i32, i32, i32, i32) {
    %c0_i32 = arith.constant 0 : i32
    %c0_i32_0 = arith.constant 0 : i32
    %c0_i32_1 = arith.constant 0 : i32
    return %arg0, %arg1, %c0_i32, %c0_i32_0 : i32, i32, i32, i32
  }
  func.func @transform_2(%arg0: i32, %arg1: i32) -> (i32, i32, i32, i32) {
    %c0_i32 = arith.constant 0 : i32
    %c0_i32_0 = arith.constant 0 : i32
    %c0_i32_1 = arith.constant 0 : i32
    return %arg0, %arg1, %c0_i32, %c0_i32_0 : i32, i32, i32, i32
  }
  func.func @transform_3(%arg0: i32, %arg1: i32) -> (i32, i32, i32) {
    %c0_i32 = arith.constant 0 : i32
    %c0_i32_0 = arith.constant 0 : i32
    %c0_i32_1 = arith.constant 0 : i32
    %c0_i32_2 = arith.constant 0 : i32
    return %c0_i32, %c0_i32_0, %c0_i32_1 : i32, i32, i32
  }
  func.func @transform_4(%arg0: i32, %arg1: i32) -> (i32, i32, i32) {
    %c0_i32 = arith.constant 0 : i32
    %c0_i32_0 = arith.constant 0 : i32
    %c0_i32_1 = arith.constant 0 : i32
    %c0_i32_2 = arith.constant 0 : i32
    return %c0_i32, %c0_i32_0, %c0_i32_1 : i32, i32, i32
  }
  func.func @transform_5(%arg0: i32, %arg1: i32) -> (i32, i32) {
    %c0_i32 = arith.constant 0 : i32
    %c0_i32_0 = arith.constant 0 : i32
    %c0_i32_1 = arith.constant 0 : i32
    return %c0_i32, %c0_i32_0 : i32, i32
  }
  func.func @transform_6(%arg0: i32, %arg1: i32) -> (i32, i32, i32, i32) {
    %c0_i32 = arith.constant 0 : i32
    %c0_i32_0 = arith.constant 0 : i32
    %c0_i32_1 = arith.constant 0 : i32
    return %arg0, %arg1, %c0_i32, %c0_i32_0 : i32, i32, i32, i32
  }
}

</mosaic_0001>

<llo_original>
// kernel: tpu_custom_call.1
$region0: #{tpu_custom_call.1}
  #allocation0 [shape = 'u32[]', space=smem, size = 0x4, offset = 0x4, fixed_abs, tag = 'smem constant byte address 0x4 - core index']
  #allocation1 [shape = 'u32[144,128]{1,0:T(1,128)}', space=vmem, size = 0x12000, scoped, tag = 'internal scratch']
  %s0 = inlined_call_operand.vmem [shape: f32[2,8,9,8], index: 0, kind: input, shape index: {}]
  %s1 = inlined_call_operand.vmem [shape: f32[2,8,9,8], index: 1, kind: input, shape index: {}]
  %s2 = inlined_call_operand.vmem [shape: f32[2,8,9,8], index: 2, kind: input, shape index: {}]
  %s3 = inlined_call_operand.vmem [shape: f32[3,8,128], index: 3, kind: input, shape index: {}]
  %s4 = inlined_call_operand.vmem [shape: f32[3,4,128], index: 4, kind: input, shape index: {}]
  %s5 = inlined_call_operand.vmem [shape: f32[1,128], index: 5, kind: input, shape index: {}]
  %s6 = inlined_call_operand.hbm [shape: f32[2,8,8,128], index: 6, kind: output, shape index: {}]
  %s7 = sld [smem:[#allocation0]]
  $region57: #{tpu_custom_call.1} parent=0
    _
  %s9 = ssub.s32 1, %s7
  %s10 = scalar_select 0, %s9, %s7
  $region1: #{tpu_custom_call.1} parent=0
    #allocation2 [shape = 'u8[65536]{0}', space=vmem, size = 0x10000, scoped, tag = 'output window, operand 0']
    #allocation3 [shape = 's32[2]{0}', space=sflag, size = 0x8, scoped, tag = 'scoped memory for tpu_custom_call.1']
    %11 = vsyncpa [#allocation3], 0
    %s12 = scalar_lea.sflag [#allocation3], 1
    %13 = vsyncpa %s12, 0
    loop: start=0, step=1, limit=4
    $region2: #{tpu_custom_call.1} parent=1 // loop_pre_header
      _
    $region3: #{tpu_custom_call.1} parent=1 // loop_header
      %s15 = sphi 0, %s19
      %p16 = scmp.ge.s32.totalorder %s15, 4
      %s22 = sphi 0, %s34
      %s23 = sphi 0, %s30
      %s24 = sphi 0, %s22
      %s25 = sphi 0, %s23
      %s26 = sphi 0, %s24
      %s27 = sphi 0, %s25
      %s39 = sphi 0, %s41
      %s42 = sphi 0, %s39
      %s43 = sphi 0, %s42
      %s59 = sphi 0, %s43
      %s67 = sphi 0, %s69
      %s70 = sphi 0, %s67
      %s71 = sphi 0, %s70
      %s87 = sphi 0, %s71
      %s95 = sphi 0, %s97
      %s98 = sphi 0, %s95
      %s99 = sphi 0, %s98
      %s115 = sphi 0, %s99
      %s119 = sphi 0, %s119
      %s121 = sphi 0, %s119
      %s122 = sphi 0, %s121
      %s136 = sphi 0, %s122
      %s140 = sphi 0, %s140
      %s142 = sphi 0, %s140
      %s143 = sphi 0, %s142
      %s157 = sphi 0, %s143
      %s161 = sphi 0, %s161
      %s163 = sphi 0, %s161
      %s164 = sphi 0, %s163
      %s178 = sphi 0, %s164
      %s186 = sphi 0, %s188
      %s189 = sphi 0, %s186
      %s190 = sphi 0, %s189
      %s206 = sphi 0, %s190
    $region4: #{tpu_custom_call.1} parent=1 // loop_header_branch
      %18 = sbr.rel (%p16) target = $region8
    $region5: #{tpu_custom_call.1} parent=1 // loop_body
      %s20 = ssub.s32 %s15, 1
      %s21 = ssub.s32 %s15, 2
      %s28 = sadd.s32 1, %s23
      %p29 = scmp.ge.s32.totalorder %s28, 1
      %s30 = scalar_select %p29, 0, %s28
      %s31 = sadd.s32 1, %s22
      %s32 = scalar_select %p29, %s31, %s22
      %p33 = scmp.ge.s32.totalorder %s32, 2
      %s34 = scalar_select %p33, 0, %s32
      %s35 = ssub.s32 %s22, %s34
      %s36 = ssub.s32 %s23, %s30
      %s37 = sor.u32 %s35, %s36
      %p38 = scmp.eq.s32.totalorder %s37, 0
      %s40 = sadd.s32 %s39, 1
      %s41 = scalar_select %p38, %s39, %s40
      %p44 = pneg %p38
      %p45 = scmp.eq.s32.totalorder %s15, 1
      %p46 = por %p44, %p45
      %p47 = scmp.ne.s32.totalorder %s39, %s42
      %p48 = scmp.eq.s32.totalorder %s15, 0
      %p49 = por %p47, %p48
      %p50 = scmp.ne.s32.totalorder %s39, %s42
      %p51 = scmp.eq.s32.totalorder %s20, 1
      %p52 = por %p50, %p51
      %p53 = scmp.ne.s32.totalorder %s42, %s43
      %p54 = scmp.eq.s32.totalorder %s20, 0
      %p55 = por %p53, %p54
      %p56 = scmp.ne.s32.totalorder %s42, %s43
      %p57 = scmp.eq.s32.totalorder %s21, 1
      %p58 = por %p56, %p57
      %p60 = scmp.ne.s32.totalorder %s43, %s59
      %p61 = scmp.eq.s32.totalorder %s21, 0
      %p62 = por %p60, %p61
      %s63 = ssub.s32 %s22, %s34
      %s64 = ssub.s32 %s23, %s30
      %s65 = sor.u32 %s63, %s64
      %p66 = scmp.eq.s32.totalorder %s65, 0
      %s68 = sadd.s32 %s67, 1
      %s69 = scalar_select %p66, %s67, %s68
      %p72 = pneg %p66
      %p73 = scmp.eq.s32.totalorder %s15, 1
      %p74 = por %p72, %p73
      %p75 = scmp.ne.s32.totalorder %s67, %s70
      %p76 = scmp.eq.s32.totalorder %s15, 0
      %p77 = por %p75, %p76
      %p78 = scmp.ne.s32.totalorder %s67, %s70
      %p79 = scmp.eq.s32.totalorder %s20, 1
      %p80 = por %p78, %p79
      %p81 = scmp.ne.s32.totalorder %s70, %s71
      %p82 = scmp.eq.s32.totalorder %s20, 0
      %p83 = por %p81, %p82
      %p84 = scmp.ne.s32.totalorder %s70, %s71
      %p85 = scmp.eq.s32.totalorder %s21, 1
      %p86 = por %p84, %p85
      %p88 = scmp.ne.s32.totalorder %s71, %s87
      %p89 = scmp.eq.s32.totalorder %s21, 0
      %p90 = por %p88, %p89
      %s91 = ssub.s32 %s22, %s34
      %s92 = ssub.s32 %s23, %s30
      %s93 = sor.u32 %s91, %s92
      %p94 = scmp.eq.s32.totalorder %s93, 0
      %s96 = sadd.s32 %s95, 1
      %s97 = scalar_select %p94, %s95, %s96
      %p100 = pneg %p94
      %p101 = scmp.eq.s32.totalorder %s15, 1
      %p102 = por %p100, %p101
      %p103 = scmp.ne.s32.totalorder %s95, %s98
      %p104 = scmp.eq.s32.totalorder %s15, 0
      %p105 = por %p103, %p104
      %p106 = scmp.ne.s32.totalorder %s95, %s98
      %p107 = scmp.eq.s32.totalorder %s20, 1
      %p108 = por %p106, %p107
      %p109 = scmp.ne.s32.totalorder %s98, %s99
      %p110 = scmp.eq.s32.totalorder %s20, 0
      %p111 = por %p109, %p110
      %p112 = scmp.ne.s32.totalorder %s98, %s99
      %p113 = scmp.eq.s32.totalorder %s21, 1
      %p114 = por %p112, %p113
      %p116 = scmp.ne.s32.totalorder %s99, %s115
      %p117 = scmp.eq.s32.totalorder %s21, 0
      %p118 = por %p116, %p117
      %s120 = sadd.s32 %s119, 1
      %p123 = scmp.eq.s32.totalorder %s15, 1
      %p124 = scmp.ne.s32.totalorder %s119, %s121
      %p125 = scmp.eq.s32.totalorder %s15, 0
      %p126 = por %p124, %p125
      %p127 = scmp.ne.s32.totalorder %s119, %s121
      %p128 = scmp.eq.s32.totalorder %s20, 1
      %p129 = por %p127, %p128
      %p130 = scmp.ne.s32.totalorder %s121, %s122
      %p131 = scmp.eq.s32.totalorder %s20, 0
      %p132 = por %p130, %p131
      %p133 = scmp.ne.s32.totalorder %s121, %s122
      %p134 = scmp.eq.s32.totalorder %s21, 1
      %p135 = por %p133, %p134
      %p137 = scmp.ne.s32.totalorder %s122, %s136
      %p138 = scmp.eq.s32.totalorder %s21, 0
      %p139 = por %p137, %p138
      %s141 = sadd.s32 %s140, 1
      %p144 = scmp.eq.s32.totalorder %s15, 1
      %p145 = scmp.ne.s32.totalorder %s140, %s142
      %p146 = scmp.eq.s32.totalorder %s15, 0
      %p147 = por %p145, %p146
      %p148 = scmp.ne.s32.totalorder %s140, %s142
      %p149 = scmp.eq.s32.totalorder %s20, 1
      %p150 = por %p148, %p149
      %p151 = scmp.ne.s32.totalorder %s142, %s143
      %p152 = scmp.eq.s32.totalorder %s20, 0
      %p153 = por %p151, %p152
      %p154 = scmp.ne.s32.totalorder %s142, %s143
      %p155 = scmp.eq.s32.totalorder %s21, 1
      %p156 = por %p154, %p155
      %p158 = scmp.ne.s32.totalorder %s143, %s157
      %p159 = scmp.eq.s32.totalorder %s21, 0
      %p160 = por %p158, %p159
      %s162 = sadd.s32 %s161, 1
      %p165 = scmp.eq.s32.totalorder %s15, 1
      %p166 = scmp.ne.s32.totalorder %s161, %s163
      %p167 = scmp.eq.s32.totalorder %s15, 0
      %p168 = por %p166, %p167
      %p169 = scmp.ne.s32.totalorder %s161, %s163
      %p170 = scmp.eq.s32.totalorder %s20, 1
      %p171 = por %p169, %p170
      %p172 = scmp.ne.s32.totalorder %s163, %s164
      %p173 = scmp.eq.s32.totalorder %s20, 0
      %p174 = por %p172, %p173
      %p175 = scmp.ne.s32.totalorder %s163, %s164
      %p176 = scmp.eq.s32.totalorder %s21, 1
      %p177 = por %p175, %p176
      %p179 = scmp.ne.s32.totalorder %s164, %s178
      %p180 = scmp.eq.s32.totalorder %s21, 0
      %p181 = por %p179, %p180
      %s182 = ssub.s32 %s22, %s34
      %s183 = ssub.s32 %s23, %s30
      %s184 = sor.u32 %s182, %s183
      %p185 = scmp.eq.s32.totalorder %s184, 0
      %s187 = sadd.s32 %s186, 1
      %s188 = scalar_select %p185, %s186, %s187
      %p191 = pneg %p185
      %p192 = scmp.eq.s32.totalorder %s15, 1
      %p193 = por %p191, %p192
      %p194 = scmp.ne.s32.totalorder %s186, %s189
      %p195 = scmp.eq.s32.totalorder %s15, 0
      %p196 = por %p194, %p195
      %p197 = scmp.ne.s32.totalorder %s186, %s189
      %p198 = scmp.eq.s32.totalorder %s20, 1
      %p199 = por %p197, %p198
      %p200 = scmp.ne.s32.totalorder %s189, %s190
      %p201 = scmp.eq.s32.totalorder %s20, 0
      %p202 = por %p200, %p201
      %p203 = scmp.ne.s32.totalorder %s189, %s190
      %p204 = scmp.eq.s32.totalorder %s21, 1
      %p205 = por %p203, %p204
      %p207 = scmp.ne.s32.totalorder %s190, %s206
      %p208 = scmp.eq.s32.totalorder %s21, 0
      %p209 = por %p207, %p208
      %p210 = scmp.le.s32.totalorder 1, %s15
      %p211 = scmp.lt.s32.totalorder %s15, 3
      %p212 = pnand %p210, %p211
      %p213 = pneg %p212
      // Predicated region
      $region9: #{tpu_custom_call.1} parent=5 // pred_check
        _
      $region10: #{tpu_custom_call.1} parent=5 // pred_check_branch
        %215 = sbr.rel (%p212) target = $region12
      $region11: #{tpu_custom_call.1} parent=5 // pred_region
        %s216 = ssub.s32 %s15, 1
        // Predicated region
        $region13: #{tpu_custom_call.1} parent=11 // pred_check
          %p217 = pneg %p132
        $region14: #{tpu_custom_call.1} parent=11 // pred_check_branch
          %219 = sbr.rel (%p217) target = $region16
        $region15: #{tpu_custom_call.1} parent=11 // pred_region
          _
        $region16: #{tpu_custom_call.1} parent=11 // pred_fallthru
          _
        // Predicated region
        $region17: #{tpu_custom_call.1} parent=11 // pred_check
          %p220 = pneg %p153
        $region18: #{tpu_custom_call.1} parent=11 // pred_check_branch
          %222 = sbr.rel (%p220) target = $region20
        $region19: #{tpu_custom_call.1} parent=11 // pred_region
          _
        $region20: #{tpu_custom_call.1} parent=11 // pred_fallthru
          _
        // Predicated region
        $region21: #{tpu_custom_call.1} parent=11 // pred_check
          %p223 = pneg %p174
        $region22: #{tpu_custom_call.1} parent=11 // pred_check_branch
          %225 = sbr.rel (%p223) target = $region24
        $region23: #{tpu_custom_call.1} parent=11 // pred_region
          _
        $region24: #{tpu_custom_call.1} parent=11 // pred_fallthru
          _
      $region12: #{tpu_custom_call.1} parent=5 // pred_fallthru
        _
      %p226 = scmp.lt.s32.totalorder %s15, 2
      // Predicated region
      $region25: #{tpu_custom_call.1} parent=5 // pred_check
        %p227 = pneg %p226
      $region26: #{tpu_custom_call.1} parent=5 // pred_check_branch
        %229 = sbr.rel (%p227) target = $region28
      $region27: #{tpu_custom_call.1} parent=5 // pred_region
        // Predicated region
        $region29: #{tpu_custom_call.1} parent=27 // pred_check
          %p230 = pneg %p49
        $region30: #{tpu_custom_call.1} parent=27 // pred_check_branch
          %232 = sbr.rel (%p230) target = $region32
        $region31: #{tpu_custom_call.1} parent=27 // pred_region
          %s233 = smul.u32 8, %s23
          %p234 = scmp.lt.s32.totalorder %s22, 1
          %s235 = scalar_select %p234, %s22, 1
          %p236 = scmp.lt.s32.totalorder %s233, 7
          %s237 = scalar_select %p236, %s233, 7
          %s238 = smul.addr %s237, 2
          %s239 = smul.addr %s235, 16
          %s240 = sadd.s32 %s238, %s239
          %s241 = smul.addr %s240, 8
          %s242 = scalar_lea.vmem %s0, %s241
          %s243 = smul.u32 8, %s23
        $region32: #{tpu_custom_call.1} parent=27 // pred_fallthru
          _
        // Predicated region
        $region33: #{tpu_custom_call.1} parent=27 // pred_check
          %p244 = pneg %p77
        $region34: #{tpu_custom_call.1} parent=27 // pred_check_branch
          %246 = sbr.rel (%p244) target = $region36
        $region35: #{tpu_custom_call.1} parent=27 // pred_region
          %s247 = smul.u32 8, %s23
          %p248 = scmp.lt.s32.totalorder %s22, 1
          %s249 = scalar_select %p248, %s22, 1
          %p250 = scmp.lt.s32.totalorder %s247, 7
          %s251 = scalar_select %p250, %s247, 7
          %s252 = smul.addr %s251, 2
          %s253 = smul.addr %s249, 16
          %s254 = sadd.s32 %s252, %s253
          %s255 = smul.addr %s254, 8
          %s256 = scalar_lea.vmem %s1, %s255
          %s257 = smul.u32 8, %s23
        $region36: #{tpu_custom_call.1} parent=27 // pred_fallthru
          _
        // Predicated region
        $region37: #{tpu_custom_call.1} parent=27 // pred_check
          %p258 = pneg %p105
        $region38: #{tpu_custom_call.1} parent=27 // pred_check_branch
          %260 = sbr.rel (%p258) target = $region40
        $region39: #{tpu_custom_call.1} parent=27 // pred_region
          %s261 = smul.u32 8, %s23
          %p262 = scmp.lt.s32.totalorder %s22, 1
          %s263 = scalar_select %p262, %s22, 1
          %p264 = scmp.lt.s32.totalorder %s261, 7
          %s265 = scalar_select %p264, %s261, 7
          %s266 = smul.addr %s265, 2
          %s267 = smul.addr %s263, 16
          %s268 = sadd.s32 %s266, %s267
          %s269 = smul.addr %s268, 8
          %s270 = scalar_lea.vmem %s2, %s269
          %s271 = smul.u32 8, %s23
        $region40: #{tpu_custom_call.1} parent=27 // pred_fallthru
          _
      $region28: #{tpu_custom_call.1} parent=5 // pred_fallthru
        _
      %p272 = scmp.le.s32.totalorder 1, %s15
      %p273 = scmp.lt.s32.totalorder %s15, 3
      %p274 = pnand %p272, %p273
      %p275 = pneg %p274
      // Predicated region
      $region41: #{tpu_custom_call.1} parent=5 // pred_check
        _
      $region42: #{tpu_custom_call.1} parent=5 // pred_check_branch
        %277 = sbr.rel (%p274) target = $region44
      $region43: #{tpu_custom_call.1} parent=5 // pred_region
        %s278 = ssub.s32 %s15, 1
        %s279 = smul.u32 8, %s25
        %p280 = scmp.lt.s32.totalorder %s24, 1
        %s281 = scalar_select %p280, %s24, 1
        %p282 = scmp.lt.s32.totalorder %s279, 7
        %s283 = scalar_select %p282, %s279, 7
        %s284 = smul.addr %s283, 2
        %s285 = smul.addr %s281, 16
        %s286 = sadd.s32 %s284, %s285
        %s287 = smul.addr %s286, 8
        %s288 = scalar_lea.vmem %s0, %s287
        %p289 = pneg %p55
        %p290 = pneg %p52
        %s291 = smul.u32 8, %s25
        %p292 = scmp.lt.s32.totalorder %s24, 1
        %s293 = scalar_select %p292, %s24, 1
        %p294 = scmp.lt.s32.totalorder %s291, 7
        %s295 = scalar_select %p294, %s291, 7
        %s296 = smul.addr %s295, 2
        %s297 = smul.addr %s293, 16
        %s298 = sadd.s32 %s296, %s297
        %s299 = smul.addr %s298, 8
        %s300 = scalar_lea.vmem %s1, %s299
        %p301 = pneg %p83
        %p302 = pneg %p80
        %s303 = smul.u32 8, %s25
        %p304 = scmp.lt.s32.totalorder %s24, 1
        %s305 = scalar_select %p304, %s24, 1
        %p306 = scmp.lt.s32.totalorder %s303, 7
        %s307 = scalar_select %p306, %s303, 7
        %s308 = smul.addr %s307, 2
        %s309 = smul.addr %s305, 16
        %s310 = sadd.s32 %s308, %s309
        %s311 = smul.addr %s310, 8
        %s312 = scalar_lea.vmem %s2, %s311
        %p313 = pneg %p111
        %p314 = pneg %p108
        %p315 = pneg %p132
        %p316 = pneg %p129
        %p317 = pneg %p153
        %p318 = pneg %p150
        %p319 = pneg %p174
        %p320 = pneg %p171
        %p321 = pneg %p202
        %p322 = pneg %p199
        %s323 = sand.u32 %s189, 1
        %s324 = scalar_lea.sflag [#allocation3], %s323
        %s325 = sand.u32 %s189, 1
        %s326 = smul.addr %s325, 64
        %s327 = scalar_lea.vmem [#allocation2], %s326
        %s328 = smul.u32 8, %s25
        %p329 = scmp.lt.s32.totalorder %s24, 1
        %s330 = scalar_select %p329, %s24, 1
        %p331 = scmp.lt.s32.totalorder %s328, 7
        %s332 = scalar_select %p331, %s328, 7
        %s333 = smul.addr %s332, 2
        %s334 = smul.addr %s330, 16
        %s335 = sadd.s32 %s333, %s334
        %s336 = smul.addr %s335, 8
        %s337 = scalar_lea.vmem %s0, %s336
        %s338 = smul.u32 8, %s25
        %s339 = smul.u32 8, %s25
        %p340 = scmp.lt.s32.totalorder %s24, 1
        %s341 = scalar_select %p340, %s24, 1
        %p342 = scmp.lt.s32.totalorder %s339, 7
        %s343 = scalar_select %p342, %s339, 7
        %s344 = smul.addr %s343, 2
        %s345 = smul.addr %s341, 16
        %s346 = sadd.s32 %s344, %s345
        %s347 = smul.addr %s346, 8
        %s348 = scalar_lea.vmem %s1, %s347
        %s349 = smul.u32 8, %s25
        %s350 = smul.u32 8, %s25
        %p351 = scmp.lt.s32.totalorder %s24, 1
        %s352 = scalar_select %p351, %s24, 1
        %p353 = scmp.lt.s32.totalorder %s350, 7
        %s354 = scalar_select %p353, %s350, 7
        %s355 = smul.addr %s354, 2
        %s356 = smul.addr %s352, 16
        %s357 = sadd.s32 %s355, %s356
        %s358 = smul.addr %s357, 8
        %s359 = scalar_lea.vmem %s2, %s358
        %s360 = smul.u32 8, %s25
        %s361 = smul.u32 8, %s25
        %v362 = vld [vmem:[%s337] sm:$0xff]
        %v363 = vld [vmem:[%s337 + $0x8] sm:$0x1]
        %v364 = vld [vmem:[%s337 + $0x10] sm:$0xff]
        %v365 = vld [vmem:[%s337 + $0x18] sm:$0x1]
        %v366 = vld [vmem:[%s337 + $0x20] sm:$0xff]
        %v367 = vld [vmem:[%s337 + $0x28] sm:$0x1]
        %v368 = vld [vmem:[%s337 + $0x30] sm:$0xff]
        %v369 = vld [vmem:[%s337 + $0x38] sm:$0x1]
        %v370 = vld [vmem:[%s337 + $0x40] sm:$0xff]
        %v371 = vld [vmem:[%s337 + $0x48] sm:$0x1]
        %v372 = vld [vmem:[%s337 + $0x50] sm:$0xff]
        %v373 = vld [vmem:[%s337 + $0x58] sm:$0x1]
        %v374 = vld [vmem:[%s337 + $0x60] sm:$0xff]
        %v375 = vld [vmem:[%s337 + $0x68] sm:$0x1]
        %v376 = vld [vmem:[%s337 + $0x70] sm:$0xff]
        %v377 = vld [vmem:[%s337 + $0x78] sm:$0x1]
        %vm394 = vcmask 1046528
        %v395 = vrot.slane %v362, 1
        %v396 = vrot.slane %v363, 1
        %v397 = vsel %vm394, %v395, %v396
        %v398 = vrot.slane %v364, 1
        %v399 = vrot.slane %v365, 1
        %v400 = vsel %vm394, %v398, %v399
        %v401 = vrot.slane %v366, 1
        %v402 = vrot.slane %v367, 1
        %v403 = vsel %vm394, %v401, %v402
        %v404 = vrot.slane %v368, 1
        %v405 = vrot.slane %v369, 1
        %v406 = vsel %vm394, %v404, %v405
        %v407 = vrot.slane %v370, 1
        %v408 = vrot.slane %v371, 1
        %v409 = vsel %vm394, %v407, %v408
        %v410 = vrot.slane %v372, 1
        %v411 = vrot.slane %v373, 1
        %v412 = vsel %vm394, %v410, %v411
        %v413 = vrot.slane %v374, 1
        %v414 = vrot.slane %v375, 1
        %v415 = vsel %vm394, %v413, %v414
        %v416 = vrot.slane %v376, 1
        %v417 = vrot.slane %v377, 1
        %v418 = vsel %vm394, %v416, %v417
        %v419 = vld [vmem:[%s3] sm:$0xff]
        %v420 = vld [vmem:[%s4] sm:$0xf]
        %vm421 = vcmask 31744
        %v422 = vsel %vm421, %v397, 0
        %v424 = vsel %vm421, %v400, 0
        %v426 = vsel %vm421, %v403, 0
        %v428 = vsel %vm421, %v406, 0
        %v430 = vsel %vm421, %v409, 0
        %v432 = vsel %vm421, %v412, 0
        %v434 = vsel %vm421, %v415, 0
        %v436 = vsel %vm421, %v418, 0
        %vm438 = vcmask 1043456
        %v440 = vsel %vm438, %v420, 0
        %442 = vmatprep.subr.mxu0 0.0
        %443 = vmatpush1.msra.mxu0 0.0
        %444 = vmatprep.subr.mxu0 0.0
        %445 = vmatpush1.msra.mxu0 0.0
        %446 = vmatprep.subr.mxu0 0.0
        %447 = vmatpush1.msra.mxu0 0.0
        %448 = vmatprep.subr.mxu0 0.0
        %449 = vmatpush1.msra.mxu0 0.0
        %450 = vmatprep.subr.mxu0 0.0
        %451 = vmatpush1.msra.mxu0 0.0
        %452 = vmatprep.subr.mxu0 0.0
        %453 = vmatpush1.msra.mxu0 0.0
        %454 = vmatprep.subr.mxu0 0.0
        %455 = vmatpush1.msra.mxu0 0.0
        %456 = vmatprep.subr.mxu0 0.0
        %457 = vmatpush1.msra.mxu0 0.0
        %458 = vmatprep.subr.mxu0 0.0
        %459 = vmatpush1.msra.mxu0 0.0
        %460 = vmatprep.subr.mxu0 0.0
        %461 = vmatpush1.msra.mxu0 0.0
        %462 = vmatprep.subr.mxu0 0.0
        %463 = vmatpush1.msra.mxu0 0.0
        %464 = vmatprep.subr.mxu0 0.0
        %465 = vmatpush1.msra.mxu0 0.0
        %466 = vmatprep.subr.mxu0 0.0
        %467 = vmatpush1.msra.mxu0 0.0
        %468 = vmatprep.subr.mxu0 0.0
        %469 = vmatpush1.msra.mxu0 0.0
        %470 = vmatprep.subr.mxu0 0.0
        %471 = vmatpush1.msra.mxu0 0.0
        %472 = vmatprep.subr.mxu0 0.0
        %473 = vmatpush1.msra.mxu0 %v440
        %474 = vmatprep.subr.mxu0 0.0
        %475 = vmatpush2.msra.mxu0 0.0
        %476 = vmatprep.subr.mxu0 0.0
        %477 = vmatpush2.msra.mxu0 0.0
        %478 = vmatprep.subr.mxu0 0.0
        %479 = vmatpush2.msra.mxu0 0.0
        %480 = vmatprep.subr.mxu0 0.0
        %481 = vmatpush2.msra.mxu0 0.0
        %482 = vmatprep.subr.mxu0 0.0
        %483 = vmatpush2.msra.mxu0 0.0
        %484 = vmatprep.subr.mxu0 0.0
        %485 = vmatpush2.msra.mxu0 0.0
        %486 = vmatprep.subr.mxu0 0.0
        %487 = vmatpush2.msra.mxu0 0.0
        %488 = vmatprep.subr.mxu0 0.0
        %489 = vmatpush2.msra.mxu0 0.0
        %490 = vmatprep.subr.mxu0 0.0
        %491 = vmatpush2.msra.mxu0 0.0
        %492 = vmatprep.subr.mxu0 0.0
        %493 = vmatpush2.msra.mxu0 0.0
        %494 = vmatprep.subr.mxu0 0.0
        %495 = vmatpush2.msra.mxu0 0.0
        %496 = vmatprep.subr.mxu0 0.0
        %497 = vmatpush2.msra.mxu0 0.0
        %498 = vmatprep.subr.mxu0 0.0
        %499 = vmatpush2.msra.mxu0 0.0
        %500 = vmatprep.subr.mxu0 0.0
        %501 = vmatpush2.msra.mxu0 0.0
        %502 = vmatprep.subr.mxu0 0.0
        %503 = vmatpush2.msra.mxu0 0.0
        %504 = vmatprep.subr.mxu0 0.0
        %505 = vmatpush2.msra.mxu0 0.0
        %506 = vmatprep.mubr.f32.mxu0 0.0
        %507 = vmatmul.mubr.f32.gmra.mxu0 %v422
        %v508 = vpop.f32.mrf.mxu0
        %v509 = vadd.f32 0.0, %v508
        %v510 = vpop.f32.mrf.mxu0
        %511 = vmatprep.mubr.f32.mxu0 0.0
        %512 = vmatmul.mubr.f32.gmra.mxu0 %v424
        %v513 = vpop.f32.mrf.mxu0
        %v514 = vadd.f32 0.0, %v513
        %v515 = vpop.f32.mrf.mxu0
        %516 = vmatprep.mubr.f32.mxu0 0.0
        %517 = vmatmul.mubr.f32.gmra.mxu0 %v426
        %v518 = vpop.f32.mrf.mxu0
        %v519 = vadd.f32 0.0, %v518
        %v520 = vpop.f32.mrf.mxu0
        %521 = vmatprep.mubr.f32.mxu0 0.0
        %522 = vmatmul.mubr.f32.gmra.mxu0 %v428
        %v523 = vpop.f32.mrf.mxu0
        %v524 = vadd.f32 0.0, %v523
        %v525 = vpop.f32.mrf.mxu0
        %526 = vmatprep.mubr.f32.mxu0 0.0
        %527 = vmatmul.mubr.f32.gmra.mxu0 %v430
        %v528 = vpop.f32.mrf.mxu0
        %v529 = vadd.f32 0.0, %v528
        %v530 = vpop.f32.mrf.mxu0
        %531 = vmatprep.mubr.f32.mxu0 0.0
        %532 = vmatmul.mubr.f32.gmra.mxu0 %v432
        %v533 = vpop.f32.mrf.mxu0
        %v534 = vadd.f32 0.0, %v533
        %v535 = vpop.f32.mrf.mxu0
        %536 = vmatprep.mubr.f32.mxu0 0.0
        %537 = vmatmul.mubr.f32.gmra.mxu0 %v434
        %v538 = vpop.f32.mrf.mxu0
        %v539 = vadd.f32 0.0, %v538
        %v540 = vpop.f32.mrf.mxu0
        %541 = vmatprep.mubr.f32.mxu0 0.0
        %542 = vmatmul.mubr.f32.gmra.mxu0 %v436
        %v543 = vpop.f32.mrf.mxu0
        %v544 = vadd.f32 0.0, %v543
        %v545 = vpop.f32.mrf.mxu0
        %546 = vdwg.mxu0
        %vm547 = vcmask 64512
        %v548 = vsel %vm547, %v362, 0
        %v550 = vsel %vm547, %v364, 0
        %v552 = vsel %vm547, %v366, 0
        %v554 = vsel %vm547, %v368, 0
        %v556 = vsel %vm547, %v370, 0
        %v558 = vsel %vm547, %v372, 0
        %v560 = vsel %vm547, %v374, 0
        %v562 = vsel %vm547, %v376, 0
        %564 = vmatprep.subr.mxu0 0.0
        %565 = vmatpush1.msra.mxu0 0.0
        %566 = vmatprep.subr.mxu0 0.0
        %567 = vmatpush1.msra.mxu0 0.0
        %568 = vmatprep.subr.mxu0 0.0
        %569 = vmatpush1.msra.mxu0 0.0
        %570 = vmatprep.subr.mxu0 0.0
        %571 = vmatpush1.msra.mxu0 0.0
        %572 = vmatprep.subr.mxu0 0.0
        %573 = vmatpush1.msra.mxu0 0.0
        %574 = vmatprep.subr.mxu0 0.0
        %575 = vmatpush1.msra.mxu0 0.0
        %576 = vmatprep.subr.mxu0 0.0
        %577 = vmatpush1.msra.mxu0 0.0
        %578 = vmatprep.subr.mxu0 0.0
        %579 = vmatpush1.msra.mxu0 0.0
        %580 = vmatprep.subr.mxu0 0.0
        %581 = vmatpush1.msra.mxu0 0.0
        %582 = vmatprep.subr.mxu0 0.0
        %583 = vmatpush1.msra.mxu0 0.0
        %584 = vmatprep.subr.mxu0 0.0
        %585 = vmatpush1.msra.mxu0 0.0
        %586 = vmatprep.subr.mxu0 0.0
        %587 = vmatpush1.msra.mxu0 0.0
        %588 = vmatprep.subr.mxu0 0.0
        %589 = vmatpush1.msra.mxu0 0.0
        %590 = vmatprep.subr.mxu0 0.0
        %591 = vmatpush1.msra.mxu0 0.0
        %592 = vmatprep.subr.mxu0 0.0
        %593 = vmatpush1.msra.mxu0 0.0
        %594 = vmatprep.subr.mxu0 0.0
        %595 = vmatpush1.msra.mxu0 %v419
        %596 = vmatprep.subr.mxu0 0.0
        %597 = vmatpush2.msra.mxu0 0.0
        %598 = vmatprep.subr.mxu0 0.0
        %599 = vmatpush2.msra.mxu0 0.0
        %600 = vmatprep.subr.mxu0 0.0
        %601 = vmatpush2.msra.mxu0 0.0
        %602 = vmatprep.subr.mxu0 0.0
        %603 = vmatpush2.msra.mxu0 0.0
        %604 = vmatprep.subr.mxu0 0.0
        %605 = vmatpush2.msra.mxu0 0.0
        %606 = vmatprep.subr.mxu0 0.0
        %607 = vmatpush2.msra.mxu0 0.0
        %608 = vmatprep.subr.mxu0 0.0
        %609 = vmatpush2.msra.mxu0 0.0
        %610 = vmatprep.subr.mxu0 0.0
        %611 = vmatpush2.msra.mxu0 0.0
        %612 = vmatprep.subr.mxu0 0.0
        %613 = vmatpush2.msra.mxu0 0.0
        %614 = vmatprep.subr.mxu0 0.0
        %615 = vmatpush2.msra.mxu0 0.0
        %616 = vmatprep.subr.mxu0 0.0
        %617 = vmatpush2.msra.mxu0 0.0
        %618 = vmatprep.subr.mxu0 0.0
        %619 = vmatpush2.msra.mxu0 0.0
        %620 = vmatprep.subr.mxu0 0.0
        %621 = vmatpush2.msra.mxu0 0.0
        %622 = vmatprep.subr.mxu0 0.0
        %623 = vmatpush2.msra.mxu0 0.0
        %624 = vmatprep.subr.mxu0 0.0
        %625 = vmatpush2.msra.mxu0 0.0
        %626 = vmatprep.subr.mxu0 0.0
        %627 = vmatpush2.msra.mxu0 0.0
        %628 = vmatprep.mubr.f32.mxu0 0.0
        %629 = vmatmul.mubr.f32.gmra.mxu0 %v548
        %v630 = vpop.f32.mrf.mxu0
        %v631 = vadd.f32 %v509, %v630
        %v632 = vpop.f32.mrf.mxu0
        %633 = vmatprep.mubr.f32.mxu0 0.0
        %634 = vmatmul.mubr.f32.gmra.mxu0 %v550
        %v635 = vpop.f32.mrf.mxu0
        %v636 = vadd.f32 %v514, %v635
        %v637 = vpop.f32.mrf.mxu0
        %638 = vmatprep.mubr.f32.mxu0 0.0
        %639 = vmatmul.mubr.f32.gmra.mxu0 %v552
        %v640 = vpop.f32.mrf.mxu0
        %v641 = vadd.f32 %v519, %v640
        %v642 = vpop.f32.mrf.mxu0
        %643 = vmatprep.mubr.f32.mxu0 0.0
        %644 = vmatmul.mubr.f32.gmra.mxu0 %v554
        %v645 = vpop.f32.mrf.mxu0
        %v646 = vadd.f32 %v524, %v645
        %v647 = vpop.f32.mrf.mxu0
        %648 = vmatprep.mubr.f32.mxu0 0.0
        %649 = vmatmul.mubr.f32.gmra.mxu0 %v556
        %v650 = vpop.f32.mrf.mxu0
        %v651 = vadd.f32 %v529, %v650
        %v652 = vpop.f32.mrf.mxu0
        %653 = vmatprep.mubr.f32.mxu0 0.0
        %654 = vmatmul.mubr.f32.gmra.mxu0 %v558
        %v655 = vpop.f32.mrf.mxu0
        %v656 = vadd.f32 %v534, %v655
        %v657 = vpop.f32.mrf.mxu0
        %658 = vmatprep.mubr.f32.mxu0 0.0
        %659 = vmatmul.mubr.f32.gmra.mxu0 %v560
        %v660 = vpop.f32.mrf.mxu0
        %v661 = vadd.f32 %v539, %v660
        %v662 = vpop.f32.mrf.mxu0
        %663 = vmatprep.mubr.f32.mxu0 0.0
        %664 = vmatmul.mubr.f32.gmra.mxu0 %v562
        %v665 = vpop.f32.mrf.mxu0
        %v666 = vadd.f32 %v544, %v665
        %v667 = vpop.f32.mrf.mxu0
        %668 = vdwg.mxu0
        %v669 = vld [vmem:[%s348] sm:$0xff]
        %v670 = vld [vmem:[%s348 + $0x8] sm:$0x1]
        %v671 = vld [vmem:[%s348 + $0x10] sm:$0xff]
        %v672 = vld [vmem:[%s348 + $0x18] sm:$0x1]
        %v673 = vld [vmem:[%s348 + $0x20] sm:$0xff]
        %v674 = vld [vmem:[%s348 + $0x28] sm:$0x1]
        %v675 = vld [vmem:[%s348 + $0x30] sm:$0xff]
        %v676 = vld [vmem:[%s348 + $0x38] sm:$0x1]
        %v677 = vld [vmem:[%s348 + $0x40] sm:$0xff]
        %v678 = vld [vmem:[%s348 + $0x48] sm:$0x1]
        %v679 = vld [vmem:[%s348 + $0x50] sm:$0xff]
        %v680 = vld [vmem:[%s348 + $0x58] sm:$0x1]
        %v681 = vld [vmem:[%s348 + $0x60] sm:$0xff]
        %v682 = vld [vmem:[%s348 + $0x68] sm:$0x1]
        %v683 = vld [vmem:[%s348 + $0x70] sm:$0xff]
        %v684 = vld [vmem:[%s348 + $0x78] sm:$0x1]
        %v701 = vrot.slane %v669, 1
        %v702 = vrot.slane %v670, 1
        %v703 = vsel %vm394, %v701, %v702
        %v704 = vrot.slane %v671, 1
        %v705 = vrot.slane %v672, 1
        %v706 = vsel %vm394, %v704, %v705
        %v707 = vrot.slane %v673, 1
        %v708 = vrot.slane %v674, 1
        %v709 = vsel %vm394, %v707, %v708
        %v710 = vrot.slane %v675, 1
        %v711 = vrot.slane %v676, 1
        %v712 = vsel %vm394, %v710, %v711
        %v713 = vrot.slane %v677, 1
        %v714 = vrot.slane %v678, 1
        %v715 = vsel %vm394, %v713, %v714
        %v716 = vrot.slane %v679, 1
        %v717 = vrot.slane %v680, 1
        %v718 = vsel %vm394, %v716, %v717
        %v719 = vrot.slane %v681, 1
        %v720 = vrot.slane %v682, 1
        %v721 = vsel %vm394, %v719, %v720
        %v722 = vrot.slane %v683, 1
        %v723 = vrot.slane %v684, 1
        %v724 = vsel %vm394, %v722, %v723
        %s725 = scalar_lea.vmem %s3, 8
        %v726 = vld [vmem:[%s725] sm:$0xff]
        %v727 = vsel %vm547, %v669, 0
        %v729 = vsel %vm547, %v671, 0
        %v731 = vsel %vm547, %v673, 0
        %v733 = vsel %vm547, %v675, 0
        %v735 = vsel %vm547, %v677, 0
        %v737 = vsel %vm547, %v679, 0
        %v739 = vsel %vm547, %v681, 0
        %v741 = vsel %vm547, %v683, 0
        %743 = vmatprep.subr.mxu0 0.0
        %744 = vmatpush1.msra.mxu0 0.0
        %745 = vmatprep.subr.mxu0 0.0
        %746 = vmatpush1.msra.mxu0 0.0
        %747 = vmatprep.subr.mxu0 0.0
        %748 = vmatpush1.msra.mxu0 0.0
        %749 = vmatprep.subr.mxu0 0.0
        %750 = vmatpush1.msra.mxu0 0.0
        %751 = vmatprep.subr.mxu0 0.0
        %752 = vmatpush1.msra.mxu0 0.0
        %753 = vmatprep.subr.mxu0 0.0
        %754 = vmatpush1.msra.mxu0 0.0
        %755 = vmatprep.subr.mxu0 0.0
        %756 = vmatpush1.msra.mxu0 0.0
        %757 = vmatprep.subr.mxu0 0.0
        %758 = vmatpush1.msra.mxu0 0.0
        %759 = vmatprep.subr.mxu0 0.0
        %760 = vmatpush1.msra.mxu0 0.0
        %761 = vmatprep.subr.mxu0 0.0
        %762 = vmatpush1.msra.mxu0 0.0
        %763 = vmatprep.subr.mxu0 0.0
        %764 = vmatpush1.msra.mxu0 0.0
        %765 = vmatprep.subr.mxu0 0.0
        %766 = vmatpush1.msra.mxu0 0.0
        %767 = vmatprep.subr.mxu0 0.0
        %768 = vmatpush1.msra.mxu0 0.0
        %769 = vmatprep.subr.mxu0 0.0
        %770 = vmatpush1.msra.mxu0 0.0
        %771 = vmatprep.subr.mxu0 0.0
        %772 = vmatpush1.msra.mxu0 0.0
        %773 = vmatprep.subr.mxu0 0.0
        %774 = vmatpush1.msra.mxu0 %v726
        %775 = vmatprep.subr.mxu0 0.0
        %776 = vmatpush2.msra.mxu0 0.0
        %777 = vmatprep.subr.mxu0 0.0
        %778 = vmatpush2.msra.mxu0 0.0
        %779 = vmatprep.subr.mxu0 0.0
        %780 = vmatpush2.msra.mxu0 0.0
        %781 = vmatprep.subr.mxu0 0.0
        %782 = vmatpush2.msra.mxu0 0.0
        %783 = vmatprep.subr.mxu0 0.0
        %784 = vmatpush2.msra.mxu0 0.0
        %785 = vmatprep.subr.mxu0 0.0
        %786 = vmatpush2.msra.mxu0 0.0
        %787 = vmatprep.subr.mxu0 0.0
        %788 = vmatpush2.msra.mxu0 0.0
        %789 = vmatprep.subr.mxu0 0.0
        %790 = vmatpush2.msra.mxu0 0.0
        %791 = vmatprep.subr.mxu0 0.0
        %792 = vmatpush2.msra.mxu0 0.0
        %793 = vmatprep.subr.mxu0 0.0
        %794 = vmatpush2.msra.mxu0 0.0
        %795 = vmatprep.subr.mxu0 0.0
        %796 = vmatpush2.msra.mxu0 0.0
        %797 = vmatprep.subr.mxu0 0.0
        %798 = vmatpush2.msra.mxu0 0.0
        %799 = vmatprep.subr.mxu0 0.0
        %800 = vmatpush2.msra.mxu0 0.0
        %801 = vmatprep.subr.mxu0 0.0
        %802 = vmatpush2.msra.mxu0 0.0
        %803 = vmatprep.subr.mxu0 0.0
        %804 = vmatpush2.msra.mxu0 0.0
        %805 = vmatprep.subr.mxu0 0.0
        %806 = vmatpush2.msra.mxu0 0.0
        %807 = vmatprep.mubr.f32.mxu0 0.0
        %808 = vmatmul.mubr.f32.gmra.mxu0 %v727
        %v809 = vpop.f32.mrf.mxu0
        %v810 = vadd.f32 0.0, %v809
        %v811 = vpop.f32.mrf.mxu0
        %812 = vmatprep.mubr.f32.mxu0 0.0
        %813 = vmatmul.mubr.f32.gmra.mxu0 %v729
        %v814 = vpop.f32.mrf.mxu0
        %v815 = vadd.f32 0.0, %v814
        %v816 = vpop.f32.mrf.mxu0
        %817 = vmatprep.mubr.f32.mxu0 0.0
        %818 = vmatmul.mubr.f32.gmra.mxu0 %v731
        %v819 = vpop.f32.mrf.mxu0
        %v820 = vadd.f32 0.0, %v819
        %v821 = vpop.f32.mrf.mxu0
        %822 = vmatprep.mubr.f32.mxu0 0.0
        %823 = vmatmul.mubr.f32.gmra.mxu0 %v733
        %v824 = vpop.f32.mrf.mxu0
        %v825 = vadd.f32 0.0, %v824
        %v826 = vpop.f32.mrf.mxu0
        %827 = vmatprep.mubr.f32.mxu0 0.0
        %828 = vmatmul.mubr.f32.gmra.mxu0 %v735
        %v829 = vpop.f32.mrf.mxu0
        %v830 = vadd.f32 0.0, %v829
        %v831 = vpop.f32.mrf.mxu0
        %832 = vmatprep.mubr.f32.mxu0 0.0
        %833 = vmatmul.mubr.f32.gmra.mxu0 %v737
        %v834 = vpop.f32.mrf.mxu0
        %v835 = vadd.f32 0.0, %v834
        %v836 = vpop.f32.mrf.mxu0
        %837 = vmatprep.mubr.f32.mxu0 0.0
        %838 = vmatmul.mubr.f32.gmra.mxu0 %v739
        %v839 = vpop.f32.mrf.mxu0
        %v840 = vadd.f32 0.0, %v839
        %v841 = vpop.f32.mrf.mxu0
        %842 = vmatprep.mubr.f32.mxu0 0.0
        %843 = vmatmul.mubr.f32.gmra.mxu0 %v741
        %v844 = vpop.f32.mrf.mxu0
        %v845 = vadd.f32 0.0, %v844
        %v846 = vpop.f32.mrf.mxu0
        %847 = vdwg.mxu0
        %v848 = vadd.f32 %v631, %v810
        %v849 = vadd.f32 %v636, %v815
        %v850 = vadd.f32 %v641, %v820
        %v851 = vadd.f32 %v646, %v825
        %v852 = vadd.f32 %v651, %v830
        %v853 = vadd.f32 %v656, %v835
        %v854 = vadd.f32 %v661, %v840
        %v855 = vadd.f32 %v666, %v845
        %s856 = scalar_lea.vmem %s4, 4
        %v857 = vld [vmem:[%s856] sm:$0xf]
        %v858 = vsel %vm421, %v703, 0
        %v860 = vsel %vm421, %v706, 0
        %v862 = vsel %vm421, %v709, 0
        %v864 = vsel %vm421, %v712, 0
        %v866 = vsel %vm421, %v715, 0
        %v868 = vsel %vm421, %v718, 0
        %v870 = vsel %vm421, %v721, 0
        %v872 = vsel %vm421, %v724, 0
        %v875 = vsel %vm438, %v857, 0
        %877 = vmatprep.subr.mxu0 0.0
        %878 = vmatpush1.msra.mxu0 0.0
        %879 = vmatprep.subr.mxu0 0.0
        %880 = vmatpush1.msra.mxu0 0.0
        %881 = vmatprep.subr.mxu0 0.0
        %882 = vmatpush1.msra.mxu0 0.0
        %883 = vmatprep.subr.mxu0 0.0
        %884 = vmatpush1.msra.mxu0 0.0
        %885 = vmatprep.subr.mxu0 0.0
        %886 = vmatpush1.msra.mxu0 0.0
        %887 = vmatprep.subr.mxu0 0.0
        %888 = vmatpush1.msra.mxu0 0.0
        %889 = vmatprep.subr.mxu0 0.0
        %890 = vmatpush1.msra.mxu0 0.0
        %891 = vmatprep.subr.mxu0 0.0
        %892 = vmatpush1.msra.mxu0 0.0
        %893 = vmatprep.subr.mxu0 0.0
        %894 = vmatpush1.msra.mxu0 0.0
        %895 = vmatprep.subr.mxu0 0.0
        %896 = vmatpush1.msra.mxu0 0.0
        %897 = vmatprep.subr.mxu0 0.0
        %898 = vmatpush1.msra.mxu0 0.0
        %899 = vmatprep.subr.mxu0 0.0
        %900 = vmatpush1.msra.mxu0 0.0
        %901 = vmatprep.subr.mxu0 0.0
        %902 = vmatpush1.msra.mxu0 0.0
        %903 = vmatprep.subr.mxu0 0.0
        %904 = vmatpush1.msra.mxu0 0.0
        %905 = vmatprep.subr.mxu0 0.0
        %906 = vmatpush1.msra.mxu0 0.0
        %907 = vmatprep.subr.mxu0 0.0
        %908 = vmatpush1.msra.mxu0 %v875
        %909 = vmatprep.subr.mxu0 0.0
        %910 = vmatpush2.msra.mxu0 0.0
        %911 = vmatprep.subr.mxu0 0.0
        %912 = vmatpush2.msra.mxu0 0.0
        %913 = vmatprep.subr.mxu0 0.0
        %914 = vmatpush2.msra.mxu0 0.0
        %915 = vmatprep.subr.mxu0 0.0
        %916 = vmatpush2.msra.mxu0 0.0
        %917 = vmatprep.subr.mxu0 0.0
        %918 = vmatpush2.msra.mxu0 0.0
        %919 = vmatprep.subr.mxu0 0.0
        %920 = vmatpush2.msra.mxu0 0.0
        %921 = vmatprep.subr.mxu0 0.0
        %922 = vmatpush2.msra.mxu0 0.0
        %923 = vmatprep.subr.mxu0 0.0
        %924 = vmatpush2.msra.mxu0 0.0
        %925 = vmatprep.subr.mxu0 0.0
        %926 = vmatpush2.msra.mxu0 0.0
        %927 = vmatprep.subr.mxu0 0.0
        %928 = vmatpush2.msra.mxu0 0.0
        %929 = vmatprep.subr.mxu0 0.0
        %930 = vmatpush2.msra.mxu0 0.0
        %931 = vmatprep.subr.mxu0 0.0
        %932 = vmatpush2.msra.mxu0 0.0
        %933 = vmatprep.subr.mxu0 0.0
        %934 = vmatpush2.msra.mxu0 0.0
        %935 = vmatprep.subr.mxu0 0.0
        %936 = vmatpush2.msra.mxu0 0.0
        %937 = vmatprep.subr.mxu0 0.0
        %938 = vmatpush2.msra.mxu0 0.0
        %939 = vmatprep.subr.mxu0 0.0
        %940 = vmatpush2.msra.mxu0 0.0
        %941 = vmatprep.mubr.f32.mxu0 0.0
        %942 = vmatmul.mubr.f32.gmra.mxu0 %v858
        %v943 = vpop.f32.mrf.mxu0
        %v944 = vadd.f32 0.0, %v943
        %v945 = vpop.f32.mrf.mxu0
        %946 = vmatprep.mubr.f32.mxu0 0.0
        %947 = vmatmul.mubr.f32.gmra.mxu0 %v860
        %v948 = vpop.f32.mrf.mxu0
        %v949 = vadd.f32 0.0, %v948
        %v950 = vpop.f32.mrf.mxu0
        %951 = vmatprep.mubr.f32.mxu0 0.0
        %952 = vmatmul.mubr.f32.gmra.mxu0 %v862
        %v953 = vpop.f32.mrf.mxu0
        %v954 = vadd.f32 0.0, %v953
        %v955 = vpop.f32.mrf.mxu0
        %956 = vmatprep.mubr.f32.mxu0 0.0
        %957 = vmatmul.mubr.f32.gmra.mxu0 %v864
        %v958 = vpop.f32.mrf.mxu0
        %v959 = vadd.f32 0.0, %v958
        %v960 = vpop.f32.mrf.mxu0
        %961 = vmatprep.mubr.f32.mxu0 0.0
        %962 = vmatmul.mubr.f32.gmra.mxu0 %v866
        %v963 = vpop.f32.mrf.mxu0
        %v964 = vadd.f32 0.0, %v963
        %v965 = vpop.f32.mrf.mxu0
        %966 = vmatprep.mubr.f32.mxu0 0.0
        %967 = vmatmul.mubr.f32.gmra.mxu0 %v868
        %v968 = vpop.f32.mrf.mxu0
        %v969 = vadd.f32 0.0, %v968
        %v970 = vpop.f32.mrf.mxu0
        %971 = vmatprep.mubr.f32.mxu0 0.0
        %972 = vmatmul.mubr.f32.gmra.mxu0 %v870
        %v973 = vpop.f32.mrf.mxu0
        %v974 = vadd.f32 0.0, %v973
        %v975 = vpop.f32.mrf.mxu0
        %976 = vmatprep.mubr.f32.mxu0 0.0
        %977 = vmatmul.mubr.f32.gmra.mxu0 %v872
        %v978 = vpop.f32.mrf.mxu0
        %v979 = vadd.f32 0.0, %v978
        %v980 = vpop.f32.mrf.mxu0
        %981 = vdwg.mxu0
        %v982 = vadd.f32 %v848, %v944
        %v983 = vadd.f32 %v849, %v949
        %v984 = vadd.f32 %v850, %v954
        %v985 = vadd.f32 %v851, %v959
        %v986 = vadd.f32 %v852, %v964
        %v987 = vadd.f32 %v853, %v969
        %v988 = vadd.f32 %v854, %v974
        %v989 = vadd.f32 %v855, %v979
        %v990 = vld [vmem:[%s359] sm:$0xff]
        %v991 = vld [vmem:[%s359 + $0x8] sm:$0x1]
        %v992 = vld [vmem:[%s359 + $0x10] sm:$0xff]
        %v993 = vld [vmem:[%s359 + $0x18] sm:$0x1]
        %v994 = vld [vmem:[%s359 + $0x20] sm:$0xff]
        %v995 = vld [vmem:[%s359 + $0x28] sm:$0x1]
        %v996 = vld [vmem:[%s359 + $0x30] sm:$0xff]
        %v997 = vld [vmem:[%s359 + $0x38] sm:$0x1]
        %v998 = vld [vmem:[%s359 + $0x40] sm:$0xff]
        %v999 = vld [vmem:[%s359 + $0x48] sm:$0x1]
        %v1000 = vld [vmem:[%s359 + $0x50] sm:$0xff]
        %v1001 = vld [vmem:[%s359 + $0x58] sm:$0x1]
        %v1002 = vld [vmem:[%s359 + $0x60] sm:$0xff]
        %v1003 = vld [vmem:[%s359 + $0x68] sm:$0x1]
        %v1004 = vld [vmem:[%s359 + $0x70] sm:$0xff]
        %v1005 = vld [vmem:[%s359 + $0x78] sm:$0x1]
        %v1022 = vrot.slane %v990, 1
        %v1023 = vrot.slane %v991, 1
        %v1024 = vsel %vm394, %v1022, %v1023
        %v1025 = vrot.slane %v992, 1
        %v1026 = vrot.slane %v993, 1
        %v1027 = vsel %vm394, %v1025, %v1026
        %v1028 = vrot.slane %v994, 1
        %v1029 = vrot.slane %v995, 1
        %v1030 = vsel %vm394, %v1028, %v1029
        %v1031 = vrot.slane %v996, 1
        %v1032 = vrot.slane %v997, 1
        %v1033 = vsel %vm394, %v1031, %v1032
        %v1034 = vrot.slane %v998, 1
        %v1035 = vrot.slane %v999, 1
        %v1036 = vsel %vm394, %v1034, %v1035
        %v1037 = vrot.slane %v1000, 1
        %v1038 = vrot.slane %v1001, 1
        %v1039 = vsel %vm394, %v1037, %v1038
        %v1040 = vrot.slane %v1002, 1
        %v1041 = vrot.slane %v1003, 1
        %v1042 = vsel %vm394, %v1040, %v1041
        %v1043 = vrot.slane %v1004, 1
        %v1044 = vrot.slane %v1005, 1
        %v1045 = vsel %vm394, %v1043, %v1044
        %s1046 = scalar_lea.vmem %s3, 16
        %v1047 = vld [vmem:[%s1046] sm:$0xff]
        %v1048 = vsel %vm547, %v990, 0
        %v1050 = vsel %vm547, %v992, 0
        %v1052 = vsel %vm547, %v994, 0
        %v1054 = vsel %vm547, %v996, 0
        %v1056 = vsel %vm547, %v998, 0
        %v1058 = vsel %vm547, %v1000, 0
        %v1060 = vsel %vm547, %v1002, 0
        %v1062 = vsel %vm547, %v1004, 0
        %1064 = vmatprep.subr.mxu0 0.0
        %1065 = vmatpush1.msra.mxu0 0.0
        %1066 = vmatprep.subr.mxu0 0.0
        %1067 = vmatpush1.msra.mxu0 0.0
        %1068 = vmatprep.subr.mxu0 0.0
        %1069 = vmatpush1.msra.mxu0 0.0
        %1070 = vmatprep.subr.mxu0 0.0
        %1071 = vmatpush1.msra.mxu0 0.0
        %1072 = vmatprep.subr.mxu0 0.0
        %1073 = vmatpush1.msra.mxu0 0.0
        %1074 = vmatprep.subr.mxu0 0.0
        %1075 = vmatpush1.msra.mxu0 0.0
        %1076 = vmatprep.subr.mxu0 0.0
        %1077 = vmatpush1.msra.mxu0 0.0
        %1078 = vmatprep.subr.mxu0 0.0
        %1079 = vmatpush1.msra.mxu0 0.0
        %1080 = vmatprep.subr.mxu0 0.0
        %1081 = vmatpush1.msra.mxu0 0.0
        %1082 = vmatprep.subr.mxu0 0.0
        %1083 = vmatpush1.msra.mxu0 0.0
        %1084 = vmatprep.subr.mxu0 0.0
        %1085 = vmatpush1.msra.mxu0 0.0
        %1086 = vmatprep.subr.mxu0 0.0
        %1087 = vmatpush1.msra.mxu0 0.0
        %1088 = vmatprep.subr.mxu0 0.0
        %1089 = vmatpush1.msra.mxu0 0.0
        %1090 = vmatprep.subr.mxu0 0.0
        %1091 = vmatpush1.msra.mxu0 0.0
        %1092 = vmatprep.subr.mxu0 0.0
        %1093 = vmatpush1.msra.mxu0 0.0
        %1094 = vmatprep.subr.mxu0 0.0
        %1095 = vmatpush1.msra.mxu0 %v1047
        %1096 = vmatprep.subr.mxu0 0.0
        %1097 = vmatpush2.msra.mxu0 0.0
        %1098 = vmatprep.subr.mxu0 0.0
        %1099 = vmatpush2.msra.mxu0 0.0
        %1100 = vmatprep.subr.mxu0 0.0
        %1101 = vmatpush2.msra.mxu0 0.0
        %1102 = vmatprep.subr.mxu0 0.0
        %1103 = vmatpush2.msra.mxu0 0.0
        %1104 = vmatprep.subr.mxu0 0.0
        %1105 = vmatpush2.msra.mxu0 0.0
        %1106 = vmatprep.subr.mxu0 0.0
        %1107 = vmatpush2.msra.mxu0 0.0
        %1108 = vmatprep.subr.mxu0 0.0
        %1109 = vmatpush2.msra.mxu0 0.0
        %1110 = vmatprep.subr.mxu0 0.0
        %1111 = vmatpush2.msra.mxu0 0.0
        %1112 = vmatprep.subr.mxu0 0.0
        %1113 = vmatpush2.msra.mxu0 0.0
        %1114 = vmatprep.subr.mxu0 0.0
        %1115 = vmatpush2.msra.mxu0 0.0
        %1116 = vmatprep.subr.mxu0 0.0
        %1117 = vmatpush2.msra.mxu0 0.0
        %1118 = vmatprep.subr.mxu0 0.0
        %1119 = vmatpush2.msra.mxu0 0.0
        %1120 = vmatprep.subr.mxu0 0.0
        %1121 = vmatpush2.msra.mxu0 0.0
        %1122 = vmatprep.subr.mxu0 0.0
        %1123 = vmatpush2.msra.mxu0 0.0
        %1124 = vmatprep.subr.mxu0 0.0
        %1125 = vmatpush2.msra.mxu0 0.0
        %1126 = vmatprep.subr.mxu0 0.0
        %1127 = vmatpush2.msra.mxu0 0.0
        %1128 = vmatprep.mubr.f32.mxu0 0.0
        %1129 = vmatmul.mubr.f32.gmra.mxu0 %v1048
        %v1130 = vpop.f32.mrf.mxu0
        %v1131 = vadd.f32 0.0, %v1130
        %v1132 = vpop.f32.mrf.mxu0
        %1133 = vmatprep.mubr.f32.mxu0 0.0
        %1134 = vmatmul.mubr.f32.gmra.mxu0 %v1050
        %v1135 = vpop.f32.mrf.mxu0
        %v1136 = vadd.f32 0.0, %v1135
        %v1137 = vpop.f32.mrf.mxu0
        %1138 = vmatprep.mubr.f32.mxu0 0.0
        %1139 = vmatmul.mubr.f32.gmra.mxu0 %v1052
        %v1140 = vpop.f32.mrf.mxu0
        %v1141 = vadd.f32 0.0, %v1140
        %v1142 = vpop.f32.mrf.mxu0
        %1143 = vmatprep.mubr.f32.mxu0 0.0
        %1144 = vmatmul.mubr.f32.gmra.mxu0 %v1054
        %v1145 = vpop.f32.mrf.mxu0
        %v1146 = vadd.f32 0.0, %v1145
        %v1147 = vpop.f32.mrf.mxu0
        %1148 = vmatprep.mubr.f32.mxu0 0.0
        %1149 = vmatmul.mubr.f32.gmra.mxu0 %v1056
        %v1150 = vpop.f32.mrf.mxu0
        %v1151 = vadd.f32 0.0, %v1150
        %v1152 = vpop.f32.mrf.mxu0
        %1153 = vmatprep.mubr.f32.mxu0 0.0
        %1154 = vmatmul.mubr.f32.gmra.mxu0 %v1058
        %v1155 = vpop.f32.mrf.mxu0
        %v1156 = vadd.f32 0.0, %v1155
        %v1157 = vpop.f32.mrf.mxu0
        %1158 = vmatprep.mubr.f32.mxu0 0.0
        %1159 = vmatmul.mubr.f32.gmra.mxu0 %v1060
        %v1160 = vpop.f32.mrf.mxu0
        %v1161 = vadd.f32 0.0, %v1160
        %v1162 = vpop.f32.mrf.mxu0
        %1163 = vmatprep.mubr.f32.mxu0 0.0
        %1164 = vmatmul.mubr.f32.gmra.mxu0 %v1062
        %v1165 = vpop.f32.mrf.mxu0
        %v1166 = vadd.f32 0.0, %v1165
        %v1167 = vpop.f32.mrf.mxu0
        %1168 = vdwg.mxu0
        %v1169 = vadd.f32 %v982, %v1131
        %v1170 = vadd.f32 %v983, %v1136
        %v1171 = vadd.f32 %v984, %v1141
        %v1172 = vadd.f32 %v985, %v1146
        %v1173 = vadd.f32 %v986, %v1151
        %v1174 = vadd.f32 %v987, %v1156
        %v1175 = vadd.f32 %v988, %v1161
        %v1176 = vadd.f32 %v989, %v1166
        %s1177 = scalar_lea.vmem %s4, 8
        %v1178 = vld [vmem:[%s1177] sm:$0xf]
        %v1179 = vsel %vm421, %v1024, 0
        %v1181 = vsel %vm421, %v1027, 0
        %v1183 = vsel %vm421, %v1030, 0
        %v1185 = vsel %vm421, %v1033, 0
        %v1187 = vsel %vm421, %v1036, 0
        %v1189 = vsel %vm421, %v1039, 0
        %v1191 = vsel %vm421, %v1042, 0
        %v1193 = vsel %vm421, %v1045, 0
        %v1196 = vsel %vm438, %v1178, 0
        %1198 = vmatprep.subr.mxu0 0.0
        %1199 = vmatpush1.msra.mxu0 0.0
        %1200 = vmatprep.subr.mxu0 0.0
        %1201 = vmatpush1.msra.mxu0 0.0
        %1202 = vmatprep.subr.mxu0 0.0
        %1203 = vmatpush1.msra.mxu0 0.0
        %1204 = vmatprep.subr.mxu0 0.0
        %1205 = vmatpush1.msra.mxu0 0.0
        %1206 = vmatprep.subr.mxu0 0.0
        %1207 = vmatpush1.msra.mxu0 0.0
        %1208 = vmatprep.subr.mxu0 0.0
        %1209 = vmatpush1.msra.mxu0 0.0
        %1210 = vmatprep.subr.mxu0 0.0
        %1211 = vmatpush1.msra.mxu0 0.0
        %1212 = vmatprep.subr.mxu0 0.0
        %1213 = vmatpush1.msra.mxu0 0.0
        %1214 = vmatprep.subr.mxu0 0.0
        %1215 = vmatpush1.msra.mxu0 0.0
        %1216 = vmatprep.subr.mxu0 0.0
        %1217 = vmatpush1.msra.mxu0 0.0
        %1218 = vmatprep.subr.mxu0 0.0
        %1219 = vmatpush1.msra.mxu0 0.0
        %1220 = vmatprep.subr.mxu0 0.0
        %1221 = vmatpush1.msra.mxu0 0.0
        %1222 = vmatprep.subr.mxu0 0.0
        %1223 = vmatpush1.msra.mxu0 0.0
        %1224 = vmatprep.subr.mxu0 0.0
        %1225 = vmatpush1.msra.mxu0 0.0
        %1226 = vmatprep.subr.mxu0 0.0
        %1227 = vmatpush1.msra.mxu0 0.0
        %1228 = vmatprep.subr.mxu0 0.0
        %1229 = vmatpush1.msra.mxu0 %v1196
        %1230 = vmatprep.subr.mxu0 0.0
        %1231 = vmatpush2.msra.mxu0 0.0
        %1232 = vmatprep.subr.mxu0 0.0
        %1233 = vmatpush2.msra.mxu0 0.0
        %1234 = vmatprep.subr.mxu0 0.0
        %1235 = vmatpush2.msra.mxu0 0.0
        %1236 = vmatprep.subr.mxu0 0.0
        %1237 = vmatpush2.msra.mxu0 0.0
        %1238 = vmatprep.subr.mxu0 0.0
        %1239 = vmatpush2.msra.mxu0 0.0
        %1240 = vmatprep.subr.mxu0 0.0
        %1241 = vmatpush2.msra.mxu0 0.0
        %1242 = vmatprep.subr.mxu0 0.0
        %1243 = vmatpush2.msra.mxu0 0.0
        %1244 = vmatprep.subr.mxu0 0.0
        %1245 = vmatpush2.msra.mxu0 0.0
        %1246 = vmatprep.subr.mxu0 0.0
        %1247 = vmatpush2.msra.mxu0 0.0
        %1248 = vmatprep.subr.mxu0 0.0
        %1249 = vmatpush2.msra.mxu0 0.0
        %1250 = vmatprep.subr.mxu0 0.0
        %1251 = vmatpush2.msra.mxu0 0.0
        %1252 = vmatprep.subr.mxu0 0.0
        %1253 = vmatpush2.msra.mxu0 0.0
        %1254 = vmatprep.subr.mxu0 0.0
        %1255 = vmatpush2.msra.mxu0 0.0
        %1256 = vmatprep.subr.mxu0 0.0
        %1257 = vmatpush2.msra.mxu0 0.0
        %1258 = vmatprep.subr.mxu0 0.0
        %1259 = vmatpush2.msra.mxu0 0.0
        %1260 = vmatprep.subr.mxu0 0.0
        %1261 = vmatpush2.msra.mxu0 0.0
        %1262 = vmatprep.mubr.f32.mxu0 0.0
        %1263 = vmatmul.mubr.f32.gmra.mxu0 %v1179
        %v1264 = vpop.f32.mrf.mxu0
        %v1265 = vadd.f32 0.0, %v1264
        %v1266 = vpop.f32.mrf.mxu0
        %1267 = vmatprep.mubr.f32.mxu0 0.0
        %1268 = vmatmul.mubr.f32.gmra.mxu0 %v1181
        %v1269 = vpop.f32.mrf.mxu0
        %v1270 = vadd.f32 0.0, %v1269
        %v1271 = vpop.f32.mrf.mxu0
        %1272 = vmatprep.mubr.f32.mxu0 0.0
        %1273 = vmatmul.mubr.f32.gmra.mxu0 %v1183
        %v1274 = vpop.f32.mrf.mxu0
        %v1275 = vadd.f32 0.0, %v1274
        %v1276 = vpop.f32.mrf.mxu0
        %1277 = vmatprep.mubr.f32.mxu0 0.0
        %1278 = vmatmul.mubr.f32.gmra.mxu0 %v1185
        %v1279 = vpop.f32.mrf.mxu0
        %v1280 = vadd.f32 0.0, %v1279
        %v1281 = vpop.f32.mrf.mxu0
        %1282 = vmatprep.mubr.f32.mxu0 0.0
        %1283 = vmatmul.mubr.f32.gmra.mxu0 %v1187
        %v1284 = vpop.f32.mrf.mxu0
        %v1285 = vadd.f32 0.0, %v1284
        %v1286 = vpop.f32.mrf.mxu0
        %1287 = vmatprep.mubr.f32.mxu0 0.0
        %1288 = vmatmul.mubr.f32.gmra.mxu0 %v1189
        %v1289 = vpop.f32.mrf.mxu0
        %v1290 = vadd.f32 0.0, %v1289
        %v1291 = vpop.f32.mrf.mxu0
        %1292 = vmatprep.mubr.f32.mxu0 0.0
        %1293 = vmatmul.mubr.f32.gmra.mxu0 %v1191
        %v1294 = vpop.f32.mrf.mxu0
        %v1295 = vadd.f32 0.0, %v1294
        %v1296 = vpop.f32.mrf.mxu0
        %1297 = vmatprep.mubr.f32.mxu0 0.0
        %1298 = vmatmul.mubr.f32.gmra.mxu0 %v1193
        %v1299 = vpop.f32.mrf.mxu0
        %v1300 = vadd.f32 0.0, %v1299
        %v1301 = vpop.f32.mrf.mxu0
        %1302 = vdwg.mxu0
        %v1303 = vadd.f32 %v1169, %v1265
        %v1304 = vadd.f32 %v1170, %v1270
        %v1305 = vadd.f32 %v1171, %v1275
        %v1306 = vadd.f32 %v1172, %v1280
        %v1307 = vadd.f32 %v1173, %v1285
        %v1308 = vadd.f32 %v1174, %v1290
        %v1309 = vadd.f32 %v1175, %v1295
        %v1310 = vadd.f32 %v1176, %v1300
        %v1311 = vld [vmem:[%s5] sm:$0x1]
        %v1313 = vlaneseq
        %v1314 = vshrl.u32 %v1313, 7
        %v1315 = vsub.s32 0, %v1314
        %v1316 = vrot.slane %v1311, %v1315
        %v1318 = vadd.f32 %v1303, %v1316
        %v1319 = vadd.f32 %v1304, %v1316
        %v1320 = vadd.f32 %v1305, %v1316
        %v1321 = vadd.f32 %v1306, %v1316
        %v1322 = vadd.f32 %v1307, %v1316
        %v1323 = vadd.f32 %v1308, %v1316
        %v1324 = vadd.f32 %v1309, %v1316
        %v1325 = vadd.f32 %v1310, %v1316
        %v1326 = vmax.f32 %v1318, 0.0
        %v1327 = vmax.f32 %v1319, 0.0
        %v1328 = vmax.f32 %v1320, 0.0
        %v1329 = vmax.f32 %v1321, 0.0
        %v1330 = vmax.f32 %v1322, 0.0
        %v1331 = vmax.f32 %v1323, 0.0
        %v1332 = vmax.f32 %v1324, 0.0
        %v1333 = vmax.f32 %v1325, 0.0
        %1334 = vst [vmem:[%s327] sm:$0xff] %v1326
        %1335 = vst [vmem:[%s327 + $0x8] sm:$0xff] %v1327
        %1336 = vst [vmem:[%s327 + $0x10] sm:$0xff] %v1328
        %1337 = vst [vmem:[%s327 + $0x18] sm:$0xff] %v1329
        %1338 = vst [vmem:[%s327 + $0x20] sm:$0xff] %v1330
        %1339 = vst [vmem:[%s327 + $0x28] sm:$0xff] %v1331
        %1340 = vst [vmem:[%s327 + $0x30] sm:$0xff] %v1332
        %1341 = vst [vmem:[%s327 + $0x38] sm:$0xff] %v1333
        %s1342 = sand.u32 %s189, 1
        %s1343 = scalar_lea.sflag [#allocation3], %s1342
        %s1344 = sand.u32 %s189, 1
        %s1345 = smul.addr %s1344, 64
        %s1346 = scalar_lea.vmem [#allocation2], %s1345
        // Predicated region
        $region45: #{tpu_custom_call.1} parent=43 // pred_check
          %p1347 = pneg %p199
        $region46: #{tpu_custom_call.1} parent=43 // pred_check_branch
          %1349 = sbr.rel (%p1347) target = $region48
        $region47: #{tpu_custom_call.1} parent=43 // pred_region
          %s1350 = smul.u32 8, %s25
          %s1352 = ssub.s32 1024, 1024
          %1353 = vsyncadd %s1343, %s1352
          %s1354 = smul.addr %s24, 8
          %s1355 = sadd.s32 %s1350, %s1354
          %s1356 = smul.addr %s1355, 128
          %s1357 = scalar_lea.hbm %s6, %s1356
          %s1358 = sshll.u32 %s1346, 4
          %s1359 = int_to_ptr.vmem [resolvable:$true] %s1358
          %1364 = dma.vmem_to_hbm [thread:$0]  %s1359, 1024, %s1357, %s1343, 128, 128, 8
        $region48: #{tpu_custom_call.1} parent=43 // pred_fallthru
          _
      $region44: #{tpu_custom_call.1} parent=5 // pred_fallthru
        _
      %p1365 = scmp.le.s32.totalorder 2, %s15
      // Predicated region
      $region49: #{tpu_custom_call.1} parent=5 // pred_check
        %p1366 = pneg %p1365
      $region50: #{tpu_custom_call.1} parent=5 // pred_check_branch
        %1368 = sbr.rel (%p1366) target = $region52
      $region51: #{tpu_custom_call.1} parent=5 // pred_region
        %s1369 = ssub.s32 %s15, 2
        // Predicated region
        $region53: #{tpu_custom_call.1} parent=51 // pred_check
          %p1370 = pneg %p205
        $region54: #{tpu_custom_call.1} parent=51 // pred_check_branch
          %1372 = sbr.rel (%p1370) target = $region56
        $region55: #{tpu_custom_call.1} parent=51 // pred_region
          %s1373 = sand.u32 %s190, 1
          %s1374 = scalar_lea.sflag [#allocation3], %s1373
          %s1375 = sand.u32 %s190, 1
          %s1376 = smul.addr %s1375, 64
          %s1377 = scalar_lea.vmem [#allocation2], %s1376
          %1378 = dma.done %s1374, 1024
        $region56: #{tpu_custom_call.1} parent=51 // pred_fallthru
          _
      $region52: #{tpu_custom_call.1} parent=5 // pred_fallthru
        _
    $region6: #{tpu_custom_call.1} parent=1 // loop_footer
      %s19 = sadd.s32 1, %s15
    $region7: #{tpu_custom_call.1} parent=1 // loop_footer_branch
      %14 = sbr.rel target = $region3
    $region8: #{tpu_custom_call.1} parent=1 // loop_exit
      _
    %1379 = vsyncpa [#allocation3], 1
    %s1380 = scalar_lea.sflag [#allocation3], 1
    %1381 = vsyncpa %s1380, 1

</llo_original>
